<compile_context>
chip_gen: v5e
topology: v5e:2x2
jax: 0.10.0
libtpu: 0.0.40
codegen_flags: <defaults>
</compile_context>

<pallas_src>
import functools

import jax
import jax.numpy as jnp
from jax.experimental import pallas as pl
from jax.experimental.pallas import tpu as pltpu


def _round_up(x, m):
    return (x + m - 1) // m * m


def _embedding_kernel(ids_ref, tbl_ref, out_ref, *, num_inst, pack):
    # ids_ref: (TR, pack) int32 -- pack consecutive token ids per output row.
    # tbl_ref: (PV, pack*D) float -- block-diagonal packed embedding table,
    #          resident in VMEM (constant index_map); rows >= pack*V are zero.
    # out_ref: (TR, pack*D) float -- lane-dense output tile.
    v = num_inst + 1

    ids = ids_ref[...]
    # clamp(max=num_inst) per the module; also clamp below at 0 so a stray
    # negative index can never select another vocabulary row.
    ids = jnp.minimum(jnp.maximum(ids, 0), num_inst)
    # Shift slot j into its own [j*V, (j+1)*V) column range of the packed table.
    ids = ids + jax.lax.broadcasted_iota(jnp.int32, ids.shape, 1) * v

    tr = ids.shape[0]
    pv = tbl_ref.shape[0]
    col = jax.lax.broadcasted_iota(jnp.int32, (tr, pv), 1)

    hit = col == ids[:, 0:1]
    for j in range(1, pack):              # pack is small & static -> unrolled
        hit = jnp.logical_or(hit, col == ids[:, j : j + 1])
    onehot = hit.astype(tbl_ref.dtype)

    # Gather-as-matmul (exact for a one-hot f32 lhs): (TR, PV) @ (PV, pack*D).
    out_ref[...] = jnp.dot(
        onehot, tbl_ref[...], preferred_element_type=jnp.float32
    ).astype(out_ref.dtype)


def topn_instruction_encoder_forward(x, emb_table, num_inst):
    """x: (B, S) integer indices; emb_table: (num_inst + 1, D) float."""
    assert x.ndim == 2
    b, s = x.shape
    v, d = emb_table.shape
    assert v == num_inst + 1

    # Lookups packed per 128-lane output row (lane-dense, unmasked stores).
    pack = 128 // d if (d < 128 and 128 % d == 0) else 1
    width = pack * d

    n = b * s
    ids_flat = x.reshape(-1).astype(jnp.int32)

    # Pad the token count to a multiple of pack, then of the row tile TR;
    # padded slots use the padding index (row num_inst) and are sliced away.
    n_packed = _round_up(n, pack)
    r_total = n_packed // pack

    # Row tile: target ~512 KiB output tiles (double-buffered by BlockSpec),
    # multiple of 8 sublanes; comfortably inside v7x's 64 MiB VMEM and far
    # below v5e/v6e's 128 MiB.
    tr = (512 * 1024) // (width * 4)
    tr = max(8, min(1024, tr)) // 8 * 8
    tr = min(tr, _round_up(r_total, 8))
    r_pad = _round_up(r_total, tr)

    ids_flat = jnp.pad(ids_flat, (0, r_pad * pack - n), constant_values=num_inst)
    ids2 = ids_flat.reshape(r_pad, pack)

    # Block-diagonal packed table: row j*V + vv holds emb[vv] in columns
    # [j*D, (j+1)*D). Rows are zero-padded to a multiple of 128 so the one-hot
    # lhs occupies a single lane-dense MXU K-block.
    tbl = jnp.kron(jnp.eye(pack, dtype=emb_table.dtype), emb_table)
    pv = _round_up(pack * v, 128)
    tbl = jnp.pad(tbl, ((0, pv - pack * v), (0, 0)))

    kernel = functools.partial(_embedding_kernel, num_inst=num_inst, pack=pack)

    cost = pl.CostEstimate(
        flops=2 * r_pad * pv * width,       # tiny one-hot-matmul fast path
        transcendentals=0,
        bytes_accessed=r_pad * width * 4 + r_pad * pack * 4 + pv * width * 4,
    )

    out_packed = pl.pallas_call(
        kernel,
        out_shape=jax.ShapeDtypeStruct((r_pad, width), emb_table.dtype),
        grid=(r_pad // tr,),
        in_specs=[
            pl.BlockSpec((tr, pack), lambda i: (i, 0)),    # ids tile
            pl.BlockSpec((pv, width), lambda i: (0, 0)),   # resident table
        ],
        out_specs=pl.BlockSpec((tr, width), lambda i: (i, 0)),
        compiler_params=pltpu.CompilerParams(
            dimension_semantics=("parallel",),   # shard across v7x's 2 TCs
            vmem_limit_bytes=32 * 1024 * 1024,   # safe on v7x (64 MiB) & v5e/v6e
        ),
        cost_estimate=cost,
    )(ids2, tbl)

    # (r_pad, pack*D) row-major == (r_pad*pack, D) row-major: pure reshape.
    out_flat = out_packed.reshape(r_pad * pack, d)[:n]
    return out_flat.reshape(b, s, d)


def make_embedding_table(num_inst, out_size, key):
    """Deterministic synthetic weights; row num_inst is zero (padding_idx)."""
    w = jax.random.normal(key, (num_inst + 1, out_size), dtype=jnp.float32)
    w = w.at[num_inst].set(0.0)  # padding_idx = num_inst
    return w


if __name__ == "__main__":
    num_inst = 10
    out_size = 32
    batch, seq = 2, 8

    key = jax.random.PRNGKey(0)
    k_idx, k_emb = jax.random.split(key)

    # Indices include values > num_inst to exercise the clamp / padding path.
    x = jax.random.randint(
        k_idx, (batch, seq), minval=0, maxval=num_inst + 4, dtype=jnp.int32
    )
    emb_table = make_embedding_table(num_inst, out_size, k_emb)

    out = topn_instruction_encoder_forward(x, emb_table, num_inst)
    out = jax.block_until_ready(out)

    # Pure-JAX reference check (clamp max=num_inst, then table lookup).
    ref = jnp.take(emb_table, jnp.minimum(x, num_inst), axis=0)
    assert out.shape == (batch, seq, out_size)
    assert jnp.allclose(out, ref, atol=1e-5, rtol=1e-5)

    print("KERNEL_OK")
</pallas_src>

<mosaic_0001>
module attributes {stable_mosaic.version = 11 : i64} {
  func.func @_embedding_kernel(%arg0: i32, %arg1: memref<8x4xi32, #tpu.memory_space<vmem>>, %arg2: memref<128x128xf32, #tpu.memory_space<vmem>>, %arg3: memref<8x128xf32, #tpu.memory_space<vmem>>) attributes {dimension_semantics = [#tpu.dimension_semantics<parallel>], iteration_bounds = array<i64: 1>, scalar_prefetch = 0 : i64, scratch_operands = 0 : i64, tpu.core_type = #tpu.core_type<tc>, window_params = [{transform_indices = @transform_0, window_bounds = array<i64: 8, 4>}, {pipeline_mode = #tpu.pipeline_mode<synchronous>, transform_indices = @transform_1, window_bounds = array<i64: 128, 128>}, {transform_indices = @transform_2, window_bounds = array<i64: 8, 128>}]} {
    %c0 = arith.constant 0 : index
    %c0_0 = arith.constant 0 : index
    %0 = vector.load %arg1[%c0, %c0_0] : memref<8x4xi32, #tpu.memory_space<vmem>>, vector<8x4xi32>
    %c0_i32 = arith.constant 0 : i32
    %1 = vector.broadcast %c0_i32 : i32 to vector<8x4xi32>
    %2 = arith.maxsi %0, %1 : vector<8x4xi32>
    %c10_i32 = arith.constant 10 : i32
    %3 = vector.broadcast %c10_i32 : i32 to vector<8x4xi32>
    %4 = arith.minsi %2, %3 : vector<8x4xi32>
    %5 = tpu.iota {dimensions = array<i32: 1>} : vector<8x4xi32>
    %c11_i32 = arith.constant 11 : i32
    %6 = vector.broadcast %c11_i32 : i32 to vector<8x4xi32>
    %7 = arith.muli %5, %6 : vector<8x4xi32>
    %8 = arith.addi %4, %7 : vector<8x4xi32>
    %9 = tpu.iota {dimensions = array<i32: 1>} : vector<8x128xi32>
    %10 = vector.extract_strided_slice %8 {offsets = [0, 0], sizes = [8, 1], strides = [1, 1]} : vector<8x4xi32> to vector<8x1xi32>
    %11 = vector.broadcast %10 : vector<8x1xi32> to vector<8x128xi32>
    %12 = arith.cmpi eq, %9, %11 : vector<8x128xi32>
    %13 = vector.extract_strided_slice %8 {offsets = [0, 1], sizes = [8, 1], strides = [1, 1]} : vector<8x4xi32> to vector<8x1xi32>
    %14 = vector.broadcast %13 : vector<8x1xi32> to vector<8x128xi32>
    %15 = arith.cmpi eq, %9, %14 : vector<8x128xi32>
    %16 = arith.ori %12, %15 : vector<8x128xi1>
    %17 = vector.extract_strided_slice %8 {offsets = [0, 2], sizes = [8, 1], strides = [1, 1]} : vector<8x4xi32> to vector<8x1xi32>
    %18 = vector.broadcast %17 : vector<8x1xi32> to vector<8x128xi32>
    %19 = arith.cmpi eq, %9, %18 : vector<8x128xi32>
    %20 = arith.ori %16, %19 : vector<8x128xi1>
    %21 = vector.extract_strided_slice %8 {offsets = [0, 3], sizes = [8, 1], strides = [1, 1]} : vector<8x4xi32> to vector<8x1xi32>
    %22 = vector.broadcast %21 : vector<8x1xi32> to vector<8x128xi32>
    %23 = arith.cmpi eq, %9, %22 : vector<8x128xi32>
    %24 = arith.ori %20, %23 : vector<8x128xi1>
    %25 = arith.extui %24 : vector<8x128xi1> to vector<8x128xi32>
    %26 = arith.sitofp %25 : vector<8x128xi32> to vector<8x128xf32>
    %c0_1 = arith.constant 0 : index
    %c0_2 = arith.constant 0 : index
    %27 = vector.load %arg2[%c0_1, %c0_2] : memref<128x128xf32, #tpu.memory_space<vmem>>, vector<128x128xf32>
    %cst = arith.constant dense<0.000000e+00> : vector<8x128xf32>
    %28 = tpu.matmul %26, %27, %cst {dimension_numbers = #tpu.dot_dimension_numbers<[1], [0], [0], [1], [0, 0, 1, 1], [], []>} : vector<8x128xf32>, vector<128x128xf32>, vector<8x128xf32> -> vector<8x128xf32>
    %c0_3 = arith.constant 0 : index
    %c0_4 = arith.constant 0 : index
    %29 = vector.load %arg3[%c0_3, %c0_4] : memref<8x128xf32, #tpu.memory_space<vmem>>, vector<8x128xf32>
    tpu.vector_store %arg3[%c0_3, %c0_4], %28 {strides = array<i32>} : memref<8x128xf32, #tpu.memory_space<vmem>>, vector<8x128xf32>,
    return
  }
  func.func @transform_0(%arg0: i32) -> (i32, i32) {
    %c0_i32 = arith.constant 0 : i32
    %c0_i32_0 = arith.constant 0 : i32
    return %arg0, %c0_i32 : i32, i32
  }
  func.func @transform_1(%arg0: i32) -> (i32, i32) {
    %c0_i32 = arith.constant 0 : i32
    %c0_i32_0 = arith.constant 0 : i32
    %c0_i32_1 = arith.constant 0 : i32
    return %c0_i32, %c0_i32_0 : i32, i32
  }
  func.func @transform_2(%arg0: i32) -> (i32, i32) {
    %c0_i32 = arith.constant 0 : i32
    %c0_i32_0 = arith.constant 0 : i32
    return %arg0, %c0_i32 : i32, i32
  }
}

</mosaic_0001>

<llo_original>
// kernel: tpu_custom_call.1
$region0: #{tpu_custom_call.1}
  #allocation0 [shape = 'u32[]', space=smem, size = 0x4, offset = 0x4, fixed_abs, tag = 'smem constant byte address 0x4 - core index']
  #allocation1 [shape = 'u32[72,128]{1,0:T(1,128)}', space=vmem, size = 0x9000, scoped, tag = 'internal scratch']
  %s0 = inlined_call_operand.vmem [shape: s32[8,4], index: 0, kind: input, shape index: {}]
  %s1 = inlined_call_operand.hbm [shape: f32[128,128], index: 1, kind: input, shape index: {}]
  %s2 = inlined_call_operand.hbm [shape: f32[8,128], index: 2, kind: output, shape index: {}]
  %s3 = sld [smem:[#allocation0]]
  $region22: #{tpu_custom_call.1} parent=0
    _
  %s5 = ssub.s32 1, %s3
  %s6 = scalar_select 0, %s5, %s3
  $region1: #{tpu_custom_call.1} parent=0
    #allocation2 [shape = 'u8[65536]{0}', space=vmem, size = 0x10000, scoped, tag = 'input window, operand 1, single buffered']
    #allocation3 [shape = 's32[1]{0}', space=sflag, size = 0x4, scoped, tag = 'scoped memory for tpu_custom_call.1']
    #allocation4 [shape = 's32[1]{0}', space=sflag, size = 0x4, scoped, tag = 'scoped memory for tpu_custom_call.1']
    #allocation5 [shape = 'u8[4096]{0}', space=vmem, size = 0x1000, scoped, tag = 'output window, operand 0, single buffered']
    %7 = vsyncpa [#allocation3], 0
    %8 = vsyncpa [#allocation4], 0
    // Predicated region
    $region2: #{tpu_custom_call.1} parent=1 // pred_check
      _
    $region3: #{tpu_custom_call.1} parent=1 // pred_check_branch
      %10 = sbr.rel (0) target = $region5
    $region4: #{tpu_custom_call.1} parent=1 // pred_region
      _
    $region5: #{tpu_custom_call.1} parent=1 // pred_fallthru
      _
    // Predicated region
    $region6: #{tpu_custom_call.1} parent=1 // pred_check
      _
    $region7: #{tpu_custom_call.1} parent=1 // pred_check_branch
      %12 = sbr.rel (0) target = $region9
    $region8: #{tpu_custom_call.1} parent=1 // pred_region
      %14 = vsyncadd [#allocation3], 0
      %s15 = sshll.u32 %s1, 4
      %s16 = int_to_ptr.hbm [resolvable:$true] %s15
      %s17 = sshll.u32 [#allocation2], 4
      %s18 = int_to_ptr.vmem [resolvable:$true] %s17
      %23 = dma.hbm_to_vmem [thread:$0]  %s16, 2048, %s18, [#allocation3], 128, 128, 8
    $region9: #{tpu_custom_call.1} parent=1 // pred_fallthru
      _
    // Predicated region
    $region10: #{tpu_custom_call.1} parent=1 // pred_check
      _
    $region11: #{tpu_custom_call.1} parent=1 // pred_check_branch
      %25 = sbr.rel (0) target = $region13
    $region12: #{tpu_custom_call.1} parent=1 // pred_region
      %27 = dma.done [#allocation3], 2048
    $region13: #{tpu_custom_call.1} parent=1 // pred_fallthru
      _
    %v28 = vld [vmem:[%s0] sm:$0xff]
    %vm29 = vcmp.gt.s32.totalorder %v28, 0
    %v30 = vsel %vm29, %v28, 0
    %vm31 = vcmp.lt.s32.totalorder %v30, 10
    %v32 = vsel %vm31, %v30, 10
    %v33 = vlaneseq
    %v34 = vand.u32 %v33, 127
    %v35 = vmul.u32 %v34, 11
    %v36 = vadd.s32 %v32, %v35
    %37 = vset.pattern.permute.xlu0 0
    %38 = vperm.xlu0 %37, %v36
    %v39 = vpop.permute.xlu0 %38
    %vm40 = vcmp.eq.s32.totalorder %v34, %v39
    %41 = vset.pattern.permute.xlu0 1
    %42 = vperm.xlu0 %41, %v36
    %v43 = vpop.permute.xlu0 %42
    %vm44 = vcmp.eq.s32.totalorder %v34, %v43
    %vm45 = vmor %vm40, %vm44
    %46 = vset.pattern.permute.xlu0 2
    %47 = vperm.xlu0 %46, %v36
    %v48 = vpop.permute.xlu0 %47
    %vm49 = vcmp.eq.s32.totalorder %v34, %v48
    %vm50 = vmor %vm45, %vm49
    %51 = vset.pattern.permute.xlu0 3
    %52 = vperm.xlu0 %51, %v36
    %v53 = vpop.permute.xlu0 %52
    %vm54 = vcmp.eq.s32.totalorder %v34, %v53
    %vm55 = vmor %vm50, %vm54
    %v56 = vsel %vm55, 1, 0
    %v57 = vcvt.s32.f32 %v56
    %v58 = vld [vmem:[#allocation2] sm:$0xff]
    %v59 = vld [vmem:[#allocation2 + $0x8] sm:$0xff]
    %v60 = vld [vmem:[#allocation2 + $0x10] sm:$0xff]
    %v61 = vld [vmem:[#allocation2 + $0x18] sm:$0xff]
    %v62 = vld [vmem:[#allocation2 + $0x20] sm:$0xff]
    %v63 = vld [vmem:[#allocation2 + $0x28] sm:$0xff]
    %v64 = vld [vmem:[#allocation2 + $0x30] sm:$0xff]
    %v65 = vld [vmem:[#allocation2 + $0x38] sm:$0xff]
    %v66 = vld [vmem:[#allocation2 + $0x40] sm:$0xff]
    %v67 = vld [vmem:[#allocation2 + $0x48] sm:$0xff]
    %v68 = vld [vmem:[#allocation2 + $0x50] sm:$0xff]
    %v69 = vld [vmem:[#allocation2 + $0x58] sm:$0xff]
    %v70 = vld [vmem:[#allocation2 + $0x60] sm:$0xff]
    %v71 = vld [vmem:[#allocation2 + $0x68] sm:$0xff]
    %v72 = vld [vmem:[#allocation2 + $0x70] sm:$0xff]
    %v73 = vld [vmem:[#allocation2 + $0x78] sm:$0xff]
    %74 = vmatpush.msra.mxu0 %v73
    %75 = vmatpush.msra.mxu0 %v72
    %76 = vmatpush.msra.mxu0 %v71
    %77 = vmatpush.msra.mxu0 %v70
    %78 = vmatpush.msra.mxu0 %v69
    %79 = vmatpush.msra.mxu0 %v68
    %80 = vmatpush.msra.mxu0 %v67
    %81 = vmatpush.msra.mxu0 %v66
    %82 = vmatpush.msra.mxu0 %v65
    %83 = vmatpush.msra.mxu0 %v64
    %84 = vmatpush.msra.mxu0 %v63
    %85 = vmatpush.msra.mxu0 %v62
    %86 = vmatpush.msra.mxu0 %v61
    %87 = vmatpush.msra.mxu0 %v60
    %88 = vmatpush.msra.mxu0 %v59
    %89 = vmatpush.msra.mxu0 %v58
    %90 = vmatmul.f32.gmra.mxu0 %v57
    %v91 = vpop.f32.mrf.mxu0
    %v92 = vadd.f32 0.0, %v91
    %93 = vdwg.mxu0
    %94 = vst [vmem:[#allocation5] sm:$0xff] %v92
    // Predicated region
    $region14: #{tpu_custom_call.1} parent=1 // pred_check
      _
    $region15: #{tpu_custom_call.1} parent=1 // pred_check_branch
      %96 = sbr.rel (0) target = $region17
    $region16: #{tpu_custom_call.1} parent=1 // pred_region
      %98 = vsyncadd [#allocation4], 0
      %s100 = sshll.u32 [#allocation5], 4
      %s101 = int_to_ptr.vmem [resolvable:$true] %s100
      %s102 = sshll.u32 %s2, 4
      %s103 = int_to_ptr.hbm [resolvable:$true] %s102
      %105 = dma.vmem_to_hbm [thread:$0]  %s101, 128, %s103, [#allocation4]
    $region17: #{tpu_custom_call.1} parent=1 // pred_fallthru
      _
    // Predicated region
    $region18: #{tpu_custom_call.1} parent=1 // pred_check
      _
    $region19: #{tpu_custom_call.1} parent=1 // pred_check_branch
      %107 = sbr.rel (0) target = $region21
    $region20: #{tpu_custom_call.1} parent=1 // pred_region
      %109 = dma.done [#allocation4], 128
    $region21: #{tpu_custom_call.1} parent=1 // pred_fallthru
      _
    %110 = vsyncpa [#allocation3], 1
    %111 = vsyncpa [#allocation4], 1

</llo_original>
